<compile_context>
chip_gen: v6e
topology: v6e:2x2x1
jax: 0.10.0
libtpu: 0.0.40
codegen_flags: <defaults>
</compile_context>

<pallas_src>
import functools
import math

import jax
import jax.numpy as jnp
from jax.experimental import pallas as pl
from jax.experimental.pallas import tpu as pltpu

_INV_LN2 = 1.0 / math.log(2.0)
_LANE = 128


def _round_up(x, m):
    return ((x + m - 1) // m) * m


def _se_loss_kernel(c_lin, batch, tile_b, hr_ref, hi_ref, vr_ref, vi_ref, out_ref):
    """One batch tile: per-row complex dot -> rate; writes the tile's rate-sum."""
    hr = hr_ref[...]
    hi = hi_ref[...]
    vr = vr_ref[...]
    vi = vi_ref[...]

    # y[b] = sum_n h[b,n] * v[b,n]  (complex dot; `scale` is folded into c_lin)
    y_re = jnp.sum(hr * vr - hi * vi, axis=-1, keepdims=True)    # (TB, 1)
    y_im = jnp.sum(hr * vi + hi * vr, axis=-1, keepdims=True)    # (TB, 1)
    bf_gain = y_re * y_re + y_im * y_im                          # |y|^2

    # snr = bf_gain * scale^2 * 10**((Tx_dBm - noise_dBm)/10);  rate = log2(1+snr)
    # (log(1+x) kept in the reference's 1+snr form; bf_gain==0 -> rate 0 cleanly)
    rate = jnp.log(1.0 + bf_gain * c_lin) * _INV_LN2             # (TB, 1)

    # Mask rows past the true batch (ragged last tile has undefined contents).
    row = pl.program_id(0) * tile_b + jax.lax.broadcasted_iota(jnp.int32, rate.shape, 0)
    rate = jnp.where(row < batch, rate, 0.0)

    out_ref[...] = jnp.sum(rate, axis=0, keepdims=True)[None]    # (1, 1, 1)


def spectral_efficiency_loss(h, tx_beam, *, scale,
                             noise_power_dBm=-94.0, tx_power_dBm=30.0,
                             vmem_budget_bytes=24 * 1024 * 1024):
    """h, tx_beam: complex [B, N] (h may also be torch-style [B, 1, N]).

    Returns  -mean_b log2(1 + 10**((Tx + 10*log10|scale * h_b . v_b|^2 - noise)/10)).
    """
    if h.ndim == 3 and h.shape[1] == 1:          # torch-style [B, 1, N]
        h = h[:, 0, :]
    B, N = h.shape
    assert tx_beam.shape == (B, N)

    # Complex -> planar f32 (no padding). Pallas has no complex dtype and JAX
    # has no zero-copy bitcast for complex, so this is one fused XLA pass.
    # TODO(synk): if the producer already emits planar/interleaved f32 planes,
    # feed them directly and skip this conversion entirely.
    hr = jnp.real(h).astype(jnp.float32)
    hi = jnp.imag(h).astype(jnp.float32)
    vr = jnp.real(tx_beam).astype(jnp.float32)
    vi = jnp.imag(tx_beam).astype(jnp.float32)

    # Batch tile from a VMEM budget: 4 planes x 2 pipeline buffers x f32, with
    # the lane dim padded to 128 *inside VMEM only* (HBM traffic stays exact).
    lane_pad = _round_up(max(N, 1), _LANE)
    vmem_bytes_per_row = 4 * 2 * lane_pad * 4
    tb_cap = max(8, (vmem_budget_bytes // vmem_bytes_per_row) // 8 * 8)
    if B <= tb_cap:
        tile_b = B                     # full-dim block: legal for any B
        grid = 1
    else:
        tile_b = tb_cap                # multiple of 8; ragged last tile masked
        grid = pl.cdiv(B, tile_b)

    c_lin = (float(scale) ** 2) * 10.0 ** ((float(tx_power_dBm) - float(noise_power_dBm)) / 10.0)
    kernel = functools.partial(_se_loss_kernel, c_lin, int(B), int(tile_b))

    in_spec = pl.BlockSpec((tile_b, N), lambda i: (i, 0))

    partial_sums = pl.pallas_call(
        kernel,
        out_shape=jax.ShapeDtypeStruct((grid, 1, 1), jnp.float32),
        grid_spec=pltpu.PrefetchScalarGridSpec(
            num_scalar_prefetch=0,
            grid=(grid,),
            in_specs=[in_spec, in_spec, in_spec, in_spec],
            out_specs=pl.BlockSpec((1, 1, 1), lambda i: (i, 0, 0)),
        ),
        compiler_params=pltpu.CompilerParams(
            dimension_semantics=("parallel",),      # independent per-tile outputs
            vmem_limit_bytes=32 * 1024 * 1024),
    )(hr, hi, vr, vi)

    return -jnp.sum(partial_sums) / B


def reference_loss(h, tx_beam, scale, noise_power_dBm=-94.0, tx_power_dBm=30.0):
    """Pure-JAX mirror of the PyTorch module (h passed as [B, N] == torch [B,1,N])."""
    y = jnp.matmul(h[:, None, :] * scale, tx_beam[..., None])   # [B,1,1]
    y = jnp.squeeze(y)
    bf_gain = jnp.abs(y) ** 2
    snr = tx_power_dBm + 10.0 * jnp.log10(bf_gain) - noise_power_dBm
    snr = 10.0 ** (snr / 10.0)
    rate = jnp.log2(1.0 + snr)
    return -jnp.mean(rate)


if __name__ == "__main__":
    B, N = 8, 16
    scale = 2.5

    key = jax.random.PRNGKey(0)
    k1, k2, k3, k4 = jax.random.split(key, 4)

    # random complex channel
    h = jax.lax.complex(jax.random.normal(k1, (B, N), jnp.float32),
                        jax.random.normal(k2, (B, N), jnp.float32))

    # unit-modulus / sqrt(N) transmit beam (what the upstream beam synthesizer emits)
    br = jax.random.normal(k3, (B, N), jnp.float32)
    bi = jax.random.normal(k4, (B, N), jnp.float32)
    mag = jnp.sqrt(br * br + bi * bi)
    tx_beam = jax.lax.complex(br / mag, bi / mag) / jnp.sqrt(jnp.float32(N))

    loss_fn = jax.jit(lambda hh, vv: spectral_efficiency_loss(hh, vv, scale=scale))
    loss = jax.block_until_ready(loss_fn(h, tx_beam))

    ref = reference_loss(h, tx_beam, scale)

    assert loss.shape == ()
    assert loss.dtype == jnp.float32
    assert jnp.allclose(loss, ref, atol=1e-4, rtol=1e-4), (loss, ref)

    print("KERNEL_OK")
</pallas_src>

<mosaic_0001>
module attributes {stable_mosaic.version = 11 : i64} {
  func.func @_se_loss_kernel(%arg0: i32, %arg1: memref<8x16xf32, #tpu.memory_space<vmem>>, %arg2: memref<8x16xf32, #tpu.memory_space<vmem>>, %arg3: memref<8x16xf32, #tpu.memory_space<vmem>>, %arg4: memref<8x16xf32, #tpu.memory_space<vmem>>, %arg5: memref<1x1x1xf32, #tpu.memory_space<vmem>>) attributes {dimension_semantics = [#tpu.dimension_semantics<parallel>], iteration_bounds = array<i64: 1>, scalar_prefetch = 0 : i64, scratch_operands = 0 : i64, tpu.core_type = #tpu.core_type<tc>, window_params = [{transform_indices = @transform_0, window_bounds = array<i64: 8, 16>}, {transform_indices = @transform_1, window_bounds = array<i64: 8, 16>}, {transform_indices = @transform_2, window_bounds = array<i64: 8, 16>}, {transform_indices = @transform_3, window_bounds = array<i64: 8, 16>}, {transform_indices = @transform_4, window_bounds = array<i64: 1, 1, 1>}]} {
    %c0 = arith.constant 0 : index
    %c0_0 = arith.constant 0 : index
    %0 = vector.load %arg1[%c0, %c0_0] : memref<8x16xf32, #tpu.memory_space<vmem>>, vector<8x16xf32>
    %c0_1 = arith.constant 0 : index
    %c0_2 = arith.constant 0 : index
    %1 = vector.load %arg2[%c0_1, %c0_2] : memref<8x16xf32, #tpu.memory_space<vmem>>, vector<8x16xf32>
    %c0_3 = arith.constant 0 : index
    %c0_4 = arith.constant 0 : index
    %2 = vector.load %arg3[%c0_3, %c0_4] : memref<8x16xf32, #tpu.memory_space<vmem>>, vector<8x16xf32>
    %c0_5 = arith.constant 0 : index
    %c0_6 = arith.constant 0 : index
    %3 = vector.load %arg4[%c0_5, %c0_6] : memref<8x16xf32, #tpu.memory_space<vmem>>, vector<8x16xf32>
    %4 = arith.mulf %0, %2 : vector<8x16xf32>
    %5 = arith.mulf %1, %3 : vector<8x16xf32>
    %6 = arith.subf %4, %5 : vector<8x16xf32>
    %cst = arith.constant dense<0.000000e+00> : vector<8xf32>
    %7 = vector.multi_reduction <add>, %6, %cst [1] : vector<8x16xf32> to vector<8xf32>
    %8 = vector.shape_cast %7 : vector<8xf32> to vector<8x1xf32>
    %9 = arith.mulf %0, %3 : vector<8x16xf32>
    %10 = arith.mulf %1, %2 : vector<8x16xf32>
    %11 = arith.addf %9, %10 : vector<8x16xf32>
    %cst_7 = arith.constant dense<0.000000e+00> : vector<8xf32>
    %12 = vector.multi_reduction <add>, %11, %cst_7 [1] : vector<8x16xf32> to vector<8xf32>
    %13 = vector.shape_cast %12 : vector<8xf32> to vector<8x1xf32>
    %14 = arith.mulf %8, %8 : vector<8x1xf32>
    %15 = arith.mulf %13, %13 : vector<8x1xf32>
    %16 = arith.addf %14, %15 : vector<8x1xf32>
    %cst_8 = arith.constant 1.56992904E+13 : f32
    %17 = vector.broadcast %cst_8 : f32 to vector<8x1xf32>
    %18 = arith.mulf %16, %17 : vector<8x1xf32>
    %cst_9 = arith.constant 1.000000e+00 : f32
    %19 = vector.broadcast %cst_9 : f32 to vector<8x1xf32>
    %20 = arith.addf %19, %18 : vector<8x1xf32>
    %21 = math.log %20 : vector<8x1xf32>
    %cst_10 = arith.constant 1.44269502 : f32
    %22 = vector.broadcast %cst_10 : f32 to vector<8x1xf32>
    %23 = arith.mulf %21, %22 : vector<8x1xf32>
    %c8_i32 = arith.constant 8 : i32
    %24 = arith.muli %arg0, %c8_i32 : i32
    %25 = tpu.iota {dimensions = array<i32: 0>} : vector<8x1xi32>
    %26 = vector.broadcast %24 : i32 to vector<8x1xi32>
    %27 = arith.addi %26, %25 : vector<8x1xi32>
    %c8_i32_11 = arith.constant 8 : i32
    %28 = vector.broadcast %c8_i32_11 : i32 to vector<8x1xi32>
    %29 = arith.cmpi slt, %27, %28 : vector<8x1xi32>
    %cst_12 = arith.constant 0.000000e+00 : f32
    %30 = vector.broadcast %cst_12 : f32 to vector<8x1xf32>
    %31 = arith.select %29, %23, %30 : vector<8x1xi1>, vector<8x1xf32>
    %cst_13 = arith.constant dense<0.000000e+00> : vector<1xf32>
    %32 = vector.multi_reduction <add>, %31, %cst_13 [0] : vector<8x1xf32> to vector<1xf32>
    %33 = vector.shape_cast %32 : vector<1xf32> to vector<1x1xf32>
    %34 = vector.shape_cast %33 : vector<1x1xf32> to vector<1x1x1xf32>
    %c0_14 = arith.constant 0 : index
    %c0_15 = arith.constant 0 : index
    %c0_16 = arith.constant 0 : index
    %35 = vector.load %arg5[%c0_14, %c0_15, %c0_16] : memref<1x1x1xf32, #tpu.memory_space<vmem>>, vector<1x1x1xf32>
    tpu.vector_store %arg5[%c0_14, %c0_15, %c0_16], %34 {strides = array<i32>} : memref<1x1x1xf32, #tpu.memory_space<vmem>>, vector<1x1x1xf32>,
    return
  }
  func.func @transform_0(%arg0: i32) -> (i32, i32) {
    %c0_i32 = arith.constant 0 : i32
    %c0_i32_0 = arith.constant 0 : i32
    return %arg0, %c0_i32 : i32, i32
  }
  func.func @transform_1(%arg0: i32) -> (i32, i32) {
    %c0_i32 = arith.constant 0 : i32
    %c0_i32_0 = arith.constant 0 : i32
    return %arg0, %c0_i32 : i32, i32
  }
  func.func @transform_2(%arg0: i32) -> (i32, i32) {
    %c0_i32 = arith.constant 0 : i32
    %c0_i32_0 = arith.constant 0 : i32
    return %arg0, %c0_i32 : i32, i32
  }
  func.func @transform_3(%arg0: i32) -> (i32, i32) {
    %c0_i32 = arith.constant 0 : i32
    %c0_i32_0 = arith.constant 0 : i32
    return %arg0, %c0_i32 : i32, i32
  }
  func.func @transform_4(%arg0: i32) -> (i32, i32, i32) {
    %c0_i32 = arith.constant 0 : i32
    %c0_i32_0 = arith.constant 0 : i32
    %c0_i32_1 = arith.constant 0 : i32
    return %arg0, %c0_i32, %c0_i32_0 : i32, i32, i32
  }
}

</mosaic_0001>

<llo_original>
// kernel: custom-call.1
$region0: #{custom-call.1}
  %s0 = inlined_call_operand.hbm [shape: c64[8,16], index: 0, kind: input, shape index: {}]
  %s1 = inlined_call_operand.vmem [shape: f32[8,16], index: 1, kind: output, shape index: {}]
  %s2 = scalar_lea.hbm %s0, 128
  $region1: #{custom-call.1} parent=0
    #allocation0 [shape = 's32[1]{0}', space=sflag, size = 0x4, scoped, tag = 'scoped memory for custom-call.1']
    %3 = vsyncpa [#allocation0], 0
    %s4 = sshll.u32 %s1, 4
    %s5 = int_to_ptr.vmem [resolvable:$true] %s4
    %7 = dma.hbm_to_vmem [thread:$0]  %s2, 128, %s5, [#allocation0]
    %8 = dma.done [#allocation0], 128
    %9 = vsyncpa [#allocation0], 1

// kernel: custom-call
$region0: #{custom-call}
  %s0 = inlined_call_operand.hbm [shape: c64[8,16], index: 0, kind: input, shape index: {}]
  %s1 = inlined_call_operand.vmem [shape: f32[8,16], index: 1, kind: output, shape index: {}]
  $region1: #{custom-call} parent=0
    #allocation0 [shape = 's32[1]{0}', space=sflag, size = 0x4, scoped, tag = 'scoped memory for custom-call']
    %2 = vsyncpa [#allocation0], 0
    %s3 = sshll.u32 %s1, 4
    %s4 = int_to_ptr.vmem [resolvable:$true] %s3
    %6 = dma.hbm_to_vmem [thread:$0]  %s0, 128, %s4, [#allocation0]
    %7 = dma.done [#allocation0], 128
    %8 = vsyncpa [#allocation0], 1

// kernel: _lambda_.1
$region0: #{_lambda_.1}
  #allocation0 [shape = 'u32[]', space=smem, size = 0x4, offset = 0x4, fixed_abs, tag = 'smem constant byte address 0x4 - core index']
  #allocation1 [shape = 'u32[144,128]{1,0:T(1,128)}', space=vmem, size = 0x12000, scoped, tag = 'internal scratch']
  %s0 = inlined_call_operand.vmem [shape: f32[8,16], index: 0, kind: input, shape index: {}]
  %s1 = inlined_call_operand.vmem [shape: f32[8,16], index: 1, kind: input, shape index: {}]
  %s2 = inlined_call_operand.vmem [shape: f32[8,16], index: 2, kind: input, shape index: {}]
  %s3 = inlined_call_operand.vmem [shape: f32[8,16], index: 3, kind: input, shape index: {}]
  %s4 = inlined_call_operand.hbm [shape: f32[1,1,1], index: 4, kind: output, shape index: {}]
  %s5 = sld [smem:[#allocation0]]
  $region26: #{_lambda_.1} parent=0
    _
  %s7 = ssub.s32 1, %s5
  %s8 = scalar_select 0, %s7, %s5
  $region1: #{_lambda_.1} parent=0
    #allocation2 [shape = 'u8[512]{0}', space=vmem, size = 0x400, scoped, tag = 'output window, operand 0, single buffered']
    #allocation3 [shape = 's32[1]{0}', space=sflag, size = 0x4, scoped, tag = 'scoped memory for _lambda_.1']
    %9 = vsyncpa [#allocation3], 0
    // Predicated region
    $region2: #{_lambda_.1} parent=1 // pred_check
      _
    $region3: #{_lambda_.1} parent=1 // pred_check_branch
      %11 = sbr.rel (0) target = $region5
    $region4: #{_lambda_.1} parent=1 // pred_region
      _
    $region5: #{_lambda_.1} parent=1 // pred_fallthru
      _
    // Predicated region
    $region6: #{_lambda_.1} parent=1 // pred_check
      _
    $region7: #{_lambda_.1} parent=1 // pred_check_branch
      %13 = sbr.rel (0) target = $region9
    $region8: #{_lambda_.1} parent=1 // pred_region
      _
    $region9: #{_lambda_.1} parent=1 // pred_fallthru
      _
    // Predicated region
    $region10: #{_lambda_.1} parent=1 // pred_check
      _
    $region11: #{_lambda_.1} parent=1 // pred_check_branch
      %15 = sbr.rel (0) target = $region13
    $region12: #{_lambda_.1} parent=1 // pred_region
      _
    $region13: #{_lambda_.1} parent=1 // pred_fallthru
      _
    // Predicated region
    $region14: #{_lambda_.1} parent=1 // pred_check
      _
    $region15: #{_lambda_.1} parent=1 // pred_check_branch
      %17 = sbr.rel (0) target = $region17
    $region16: #{_lambda_.1} parent=1 // pred_region
      _
    $region17: #{_lambda_.1} parent=1 // pred_fallthru
      _
    %v18 = vld [vmem:[%s0] sm:$0xff]
    %v19 = vld [vmem:[%s1] sm:$0xff]
    %v20 = vld [vmem:[%s2] sm:$0xff]
    %v21 = vld [vmem:[%s3] sm:$0xff]
    %v22 = vmul.f32 %v18, %v20
    %v23 = vmul.f32 %v19, %v21
    %v24 = vsub.f32 %v22, %v23
    %vm25 = vcmask 130048
    %v26 = vsel %vm25, %v24, 0.0
    %27 = vadd.xlane.f32.xlu0 %v26
    %v28 = vpop.xlane.xlu0 %27
    %v29 = vmul.f32 %v18, %v21
    %v30 = vmul.f32 %v19, %v20
    %v31 = vadd.f32 %v29, %v30
    %v32 = vsel %vm25, %v31, 0.0
    %33 = vadd.xlane.f32.xlu0 %v32
    %v34 = vpop.xlane.xlu0 %33
    %v35 = vmul.f32 %v28, %v28
    %v36 = vmul.f32 %v34, %v34
    %v37 = vadd.f32 %v35, %v36
    %v38 = vmul.f32 %v37, 1.569929e+13
    %v39 = vadd.f32 %v38, 1.0
    %v40 = vlog2.pop %v39
    %v41 = vmul.f32 %v40, 0.6931472
    %v42 = vmul.f32 %v41, 1.442695
    %s43 = smul.u32 0, 8
    %v44 = vlaneseq
    %v45 = vshrl.u32 %v44, 7
    %v46 = vstv %s43
    %v47 = vadd.s32 %v46, %v45
    %vm48 = vcmp.lt.s32.totalorder %v47, 8
    %v49 = vsel %vm48, %v42, 0.0
    %v50 = vrot.slane %v49, 4
    %v51 = vadd.f32 %v49, %v50
    %v52 = vrot.slane %v51, 2
    %v53 = vadd.f32 %v51, %v52
    %v54 = vrot.slane %v53, 1
    %v55 = vadd.f32 %v53, %v54
    %vm56 = vcmask 0
    %57 = vst.msk [vmem:[#allocation2] sm:$0x1] %vm56, %v55
    // Predicated region
    $region18: #{_lambda_.1} parent=1 // pred_check
      _
    $region19: #{_lambda_.1} parent=1 // pred_check_branch
      %59 = sbr.rel (0) target = $region21
    $region20: #{_lambda_.1} parent=1 // pred_region
      %s61 = ssub.s32 16, 16
      %62 = vsyncadd [#allocation3], %s61
      %s64 = sshll.u32 [#allocation2], 4
      %s65 = int_to_ptr.vmem [resolvable:$true] %s64
      %67 = dma.vmem_to_hbm [thread:$0]  %s65, 16, %s4, [#allocation3]
    $region21: #{_lambda_.1} parent=1 // pred_fallthru
      _
    // Predicated region
    $region22: #{_lambda_.1} parent=1 // pred_check
      _
    $region23: #{_lambda_.1} parent=1 // pred_check_branch
      %69 = sbr.rel (0) target = $region25
    $region24: #{_lambda_.1} parent=1 // pred_region
      %70 = dma.done [#allocation3], 16
    $region25: #{_lambda_.1} parent=1 // pred_fallthru
      _
    %71 = vsyncpa [#allocation3], 1

</llo_original>
